<compile_context>
chip_gen: v5e
topology: v5e:2x2
jax: 0.10.0
libtpu: 0.0.40
codegen_flags: <defaults>
</compile_context>

<pallas_src>
import functools

import jax
import jax.numpy as jnp
from jax.experimental import pallas as pl
from jax.experimental.pallas import tpu as pltpu


# ---------------------------------------------------------------------------
# Pallas kernel: feature MLP, fused dueling streams (combine pre-folded into
# weights), per-(batch, action) softmax over lane-aligned 128-wide atom blocks.
# ---------------------------------------------------------------------------
def rainbow_kernel(x_ref,
                   w1_ref, b1_ref, w2_ref, b2_ref,
                   ws1_ref, bs1_ref, ws2_ref, bs2_ref,
                   out_ref, q_ref,
                   *, action_dim, atom_pad):
    x = x_ref[...]

    # feature_layer: Linear -> ReLU -> Linear -> ReLU
    f = jnp.dot(x, w1_ref[...], preferred_element_type=jnp.float32) + b1_ref[...]
    f = jnp.maximum(f, 0.0)
    f = jnp.dot(f, w2_ref[...], preferred_element_type=jnp.float32) + b2_ref[...]
    f = jnp.maximum(f, 0.0)

    # Fused first NoisyLinear of both streams: (B, H) @ (H, 2H) -> [vh | ah]
    h = jnp.dot(f, ws1_ref[...], preferred_element_type=jnp.float32) + bs1_ref[...]
    h = jnp.maximum(h, 0.0)

    # Fused second NoisyLinear with the dueling combine folded into ws2/bs2:
    # lane block [j*128:(j+1)*128] of the result is q_atoms for action j
    # (padded atom lanes carry a -1e30 bias -> exp underflows to exact 0).
    # Routed through VMEM scratch so the (tile_b, A*128) result never has to
    # live entirely in vregs (no spills).
    q_ref[...] = jnp.dot(h, ws2_ref[...], preferred_element_type=jnp.float32) + bs2_ref[...]

    # Per-action softmax over (padded) atoms; store each 128-wide lane-aligned
    # block directly so the store of action j overlaps work on action j+1.
    for j in range(action_dim):
        lo = j * atom_pad
        q = q_ref[:, lo:lo + atom_pad]                       # (tile_b, 128) aligned view
        m = jnp.max(q, axis=-1, keepdims=True)
        e = jnp.exp(q - m)                                   # pad lanes -> exact 0
        denom = jnp.sum(e, axis=-1, keepdims=True)
        out_ref[:, lo:lo + atom_pad] = (e / denom).astype(out_ref.dtype)


# ---------------------------------------------------------------------------
# Wrapper: fuse/pad/fold parameters, grid over batch, call pallas_call.
# ---------------------------------------------------------------------------
@functools.partial(jax.jit, static_argnames=("action_dim", "atom_size"))
def rainbow_forward(x, params, *, action_dim, atom_size):
    batch, state_dim = x.shape
    hidden_dim = params["w1"].shape[1]
    atom_pad = ((atom_size + 127) // 128) * 128              # 51 -> 128
    out_lanes = action_dim * atom_pad
    pad = atom_pad - atom_size

    # --- fuse stream-1 weights: [wv1 | wa1], [bv1 | ba1] ---
    ws1 = jnp.concatenate([params["wv1"], params["wa1"]], axis=1)   # (H, 2H)
    bs1 = jnp.concatenate([params["bv1"], params["ba1"]], axis=1)   # (1, 2H)

    # --- fold dueling combine into the fused second-layer weights ---
    #   q_j = vh @ wv2 + ah @ (wa2_j - mean_k wa2_k) + (bv2 + ba2_j - mean_k ba2_k)
    wa2 = params["wa2"].reshape(hidden_dim, action_dim, atom_size)
    ba2 = params["ba2"].reshape(1, action_dim, atom_size)
    wa2c = wa2 - wa2.mean(axis=1, keepdims=True)                    # (H, A, 51)
    b_fold = params["bv2"][:, None, :] + ba2 - ba2.mean(axis=1, keepdims=True)

    wv2p = jnp.pad(params["wv2"], ((0, 0), (0, pad)))               # (H, 128)
    wa2cp = jnp.pad(wa2c, ((0, 0), (0, 0), (0, pad)))               # (H, A, 128)
    top = jnp.broadcast_to(wv2p[:, None, :], (hidden_dim, action_dim, atom_pad))
    ws2 = jnp.concatenate([top.reshape(hidden_dim, out_lanes),
                           wa2cp.reshape(hidden_dim, out_lanes)], axis=0)  # (2H, A*128)
    # Padded atom lanes get a -1e30 bias so they vanish in the softmax
    # without any in-kernel masking.
    bs2 = jnp.pad(b_fold, ((0, 0), (0, 0), (0, pad)),
                  constant_values=-1e30).reshape(1, out_lanes)      # (1, A*128)

    # --- batch tiling: >=2 tiles whenever batch > 8 so the 'parallel' axis
    #     shards across both v7x TensorCores; on v6e (single TC, 128 MiB VMEM)
    #     tile_b can be swept upward for large batches now that spills are gone.
    half = (batch + 1) // 2
    tile_b = min(64, ((half + 7) // 8) * 8)
    num_tiles = (batch + tile_b - 1) // tile_b
    padded_batch = num_tiles * tile_b
    if padded_batch != batch:
        x = jnp.pad(x, ((0, padded_batch - batch), (0, 0)))

    weights = (params["w1"], params["b1"], params["w2"], params["b2"],
               ws1, bs1, ws2, bs2)

    def full_spec(arr):
        # Constant index_map -> block stays resident across grid steps.
        return pl.BlockSpec(arr.shape, lambda i: (0, 0))

    in_specs = [pl.BlockSpec((tile_b, state_dim), lambda i: (i, 0))]
    in_specs += [full_spec(w) for w in weights]
    out_spec = pl.BlockSpec((tile_b, out_lanes), lambda i: (i, 0))

    # Cost hint for XLA's scheduler.
    matmul_flops = 2 * padded_batch * (
        state_dim * hidden_dim
        + hidden_dim * hidden_dim
        + hidden_dim * (2 * hidden_dim)
        + (2 * hidden_dim) * out_lanes)
    epilogue_flops = padded_batch * out_lanes * 6
    param_elems = sum(int(w.size) for w in weights)
    cost = pl.CostEstimate(
        flops=matmul_flops + epilogue_flops,
        transcendentals=padded_batch * out_lanes,
        bytes_accessed=4 * (padded_batch * (state_dim + out_lanes) + param_elems),
    )

    kernel = functools.partial(rainbow_kernel,
                               action_dim=action_dim,
                               atom_pad=atom_pad)

    out_flat = pl.pallas_call(
        kernel,
        out_shape=jax.ShapeDtypeStruct((padded_batch, out_lanes), jnp.float32),
        grid=(num_tiles,),
        in_specs=in_specs,
        out_specs=out_spec,
        scratch_shapes=[pltpu.VMEM((tile_b, out_lanes), jnp.float32)],
        cost_estimate=cost,
        compiler_params=pltpu.CompilerParams(
            dimension_semantics=("parallel",),
            vmem_limit_bytes=32 * 1024 * 1024,   # params + tiles + scratch << this
        ),
    )(x, *weights)

    # Recover (batch, action_dim, atom_size) view in the wrapper (lane-dense
    # kernel output; padded lanes are exact zeros and are sliced off here).
    out = out_flat.reshape(padded_batch, action_dim, atom_pad)
    return out[:batch, :, :atom_size]


# ---------------------------------------------------------------------------
# Deterministic parameter construction mirroring the PyTorch __init__.
# ---------------------------------------------------------------------------
def _scale_noise(key, size):
    x = jax.random.normal(key, (size,), jnp.float32)
    return jnp.sign(x) * jnp.sqrt(jnp.abs(x))


def _linear_params(key, in_f, out_f):
    kw, kb = jax.random.split(key)
    bound = 1.0 / jnp.sqrt(in_f)
    w = jax.random.uniform(kw, (out_f, in_f), jnp.float32, -bound, bound)
    b = jax.random.uniform(kb, (out_f,), jnp.float32, -bound, bound)
    return w, b


def _noisy_linear_params(key, in_f, out_f, std_init=0.5):
    """Return effective (training-mode) weight/bias: mu + sigma * epsilon."""
    kmu_w, kmu_b, kin, kout = jax.random.split(key, 4)
    mu_range = 1.0 / jnp.sqrt(in_f)
    weight_mu = jax.random.uniform(kmu_w, (out_f, in_f), jnp.float32, -mu_range, mu_range)
    bias_mu = jax.random.uniform(kmu_b, (out_f,), jnp.float32, -mu_range, mu_range)
    weight_sigma = jnp.full((out_f, in_f), std_init / jnp.sqrt(in_f), jnp.float32)
    bias_sigma = jnp.full((out_f,), std_init / jnp.sqrt(out_f), jnp.float32)
    eps_in = _scale_noise(kin, in_f)
    eps_out = _scale_noise(kout, out_f)
    weight_eps = jnp.outer(eps_out, eps_in)
    w = weight_mu + weight_sigma * weight_eps
    b = bias_mu + bias_sigma * eps_out
    return w, b


def make_params(key, state_dim, action_dim, atom_size, hidden_dim, noisy_std=0.5):
    keys = jax.random.split(key, 6)
    w1, b1 = _linear_params(keys[0], state_dim, hidden_dim)
    w2, b2 = _linear_params(keys[1], hidden_dim, hidden_dim)
    wv1, bv1 = _noisy_linear_params(keys[2], hidden_dim, hidden_dim, noisy_std)
    wv2, bv2 = _noisy_linear_params(keys[3], hidden_dim, atom_size, noisy_std)
    wa1, ba1 = _noisy_linear_params(keys[4], hidden_dim, hidden_dim, noisy_std)
    wa2, ba2 = _noisy_linear_params(keys[5], hidden_dim, action_dim * atom_size, noisy_std)

    # (in, out) weights, (1, out) biases.
    def t(w):
        return jnp.asarray(w).T

    def row(b):
        return jnp.asarray(b)[None, :]

    return {
        "w1": t(w1), "b1": row(b1), "w2": t(w2), "b2": row(b2),
        "wv1": t(wv1), "bv1": row(bv1), "wv2": t(wv2), "bv2": row(bv2),
        "wa1": t(wa1), "ba1": row(ba1), "wa2": t(wa2), "ba2": row(ba2),
    }


# ---------------------------------------------------------------------------
# Pure-JAX reference (mirrors PyTorch forward) for correctness check.
# ---------------------------------------------------------------------------
def reference_forward(x, p, action_dim, atom_size):
    f = jnp.maximum(x @ p["w1"] + p["b1"], 0.0)
    f = jnp.maximum(f @ p["w2"] + p["b2"], 0.0)
    vh = jnp.maximum(f @ p["wv1"] + p["bv1"], 0.0)
    value = (vh @ p["wv2"] + p["bv2"]).reshape(-1, 1, atom_size)
    ah = jnp.maximum(f @ p["wa1"] + p["ba1"], 0.0)
    adv = (ah @ p["wa2"] + p["ba2"]).reshape(-1, action_dim, atom_size)
    q_atoms = value + adv - adv.mean(axis=1, keepdims=True)
    return jax.nn.softmax(q_atoms, axis=2)


if __name__ == "__main__":
    STATE_DIM = 16
    ACTION_DIM = 4
    ATOM_SIZE = 51
    HIDDEN_DIM = 32
    BATCH = 2

    key = jax.random.PRNGKey(0)
    k_x, k_p = jax.random.split(key)
    x = jax.random.normal(k_x, (BATCH, STATE_DIM), jnp.float32)
    params = make_params(k_p, STATE_DIM, ACTION_DIM, ATOM_SIZE, HIDDEN_DIM)

    q_dist = rainbow_forward(x, params, action_dim=ACTION_DIM, atom_size=ATOM_SIZE)
    q_dist = jax.block_until_ready(q_dist)

    ref = reference_forward(x, params, ACTION_DIM, ATOM_SIZE)
    assert q_dist.shape == (BATCH, ACTION_DIM, ATOM_SIZE)
    assert jnp.allclose(q_dist, ref, atol=1e-5, rtol=1e-5), "mismatch vs JAX reference"
    assert jnp.allclose(q_dist.sum(axis=2), 1.0, atol=1e-5), "softmax rows must sum to 1"

    print("KERNEL_OK")
</pallas_src>

<mosaic_0001>
module attributes {stable_mosaic.version = 11 : i64} {
  func.func @rainbow_kernel(%arg0: i32, %arg1: memref<8x16xf32, #tpu.memory_space<vmem>>, %arg2: memref<16x32xf32, #tpu.memory_space<vmem>>, %arg3: memref<1x32xf32, #tpu.memory_space<vmem>>, %arg4: memref<32x32xf32, #tpu.memory_space<vmem>>, %arg5: memref<1x32xf32, #tpu.memory_space<vmem>>, %arg6: memref<32x64xf32, #tpu.memory_space<vmem>>, %arg7: memref<1x64xf32, #tpu.memory_space<vmem>>, %arg8: memref<64x512xf32, #tpu.memory_space<vmem>>, %arg9: memref<1x512xf32, #tpu.memory_space<vmem>>, %arg10: memref<8x512xf32, #tpu.memory_space<vmem>>, %arg11: memref<8x512xf32, #tpu.memory_space<vmem>>) attributes {dimension_semantics = [#tpu.dimension_semantics<parallel>], iteration_bounds = array<i64: 1>, scalar_prefetch = 0 : i64, scratch_operands = 1 : i64, tpu.core_type = #tpu.core_type<tc>, window_params = [{transform_indices = @transform_0, window_bounds = array<i64: 8, 16>}, {pipeline_mode = #tpu.pipeline_mode<synchronous>, transform_indices = @transform_1, window_bounds = array<i64: 16, 32>}, {pipeline_mode = #tpu.pipeline_mode<synchronous>, transform_indices = @transform_2, window_bounds = array<i64: 1, 32>}, {pipeline_mode = #tpu.pipeline_mode<synchronous>, transform_indices = @transform_3, window_bounds = array<i64: 32, 32>}, {pipeline_mode = #tpu.pipeline_mode<synchronous>, transform_indices = @transform_4, window_bounds = array<i64: 1, 32>}, {pipeline_mode = #tpu.pipeline_mode<synchronous>, transform_indices = @transform_5, window_bounds = array<i64: 32, 64>}, {pipeline_mode = #tpu.pipeline_mode<synchronous>, transform_indices = @transform_6, window_bounds = array<i64: 1, 64>}, {pipeline_mode = #tpu.pipeline_mode<synchronous>, transform_indices = @transform_7, window_bounds = array<i64: 64, 512>}, {pipeline_mode = #tpu.pipeline_mode<synchronous>, transform_indices = @transform_8, window_bounds = array<i64: 1, 512>}, {transform_indices = @transform_9, window_bounds = array<i64: 8, 512>}]} {
    %c0 = arith.constant 0 : index
    %c0_0 = arith.constant 0 : index
    %0 = vector.load %arg1[%c0, %c0_0] : memref<8x16xf32, #tpu.memory_space<vmem>>, vector<8x16xf32>
    %c0_1 = arith.constant 0 : index
    %c0_2 = arith.constant 0 : index
    %1 = vector.load %arg2[%c0_1, %c0_2] : memref<16x32xf32, #tpu.memory_space<vmem>>, vector<16x32xf32>
    %cst = arith.constant dense<0.000000e+00> : vector<8x32xf32>
    %2 = tpu.matmul %0, %1, %cst {dimension_numbers = #tpu.dot_dimension_numbers<[1], [0], [0], [1], [0, 0, 1, 1], [], []>} : vector<8x16xf32>, vector<16x32xf32>, vector<8x32xf32> -> vector<8x32xf32>
    %c0_3 = arith.constant 0 : index
    %c0_4 = arith.constant 0 : index
    %3 = vector.load %arg3[%c0_3, %c0_4] : memref<1x32xf32, #tpu.memory_space<vmem>>, vector<1x32xf32>
    %4 = vector.broadcast %3 : vector<1x32xf32> to vector<8x32xf32>
    %5 = arith.addf %2, %4 : vector<8x32xf32>
    %cst_5 = arith.constant 0.000000e+00 : f32
    %6 = vector.broadcast %cst_5 : f32 to vector<8x32xf32>
    %7 = arith.maximumf %5, %6 : vector<8x32xf32>
    %c0_6 = arith.constant 0 : index
    %c0_7 = arith.constant 0 : index
    %8 = vector.load %arg4[%c0_6, %c0_7] : memref<32x32xf32, #tpu.memory_space<vmem>>, vector<32x32xf32>
    %cst_8 = arith.constant dense<0.000000e+00> : vector<8x32xf32>
    %9 = tpu.matmul %7, %8, %cst_8 {dimension_numbers = #tpu.dot_dimension_numbers<[1], [0], [0], [1], [0, 0, 1, 1], [], []>} : vector<8x32xf32>, vector<32x32xf32>, vector<8x32xf32> -> vector<8x32xf32>
    %c0_9 = arith.constant 0 : index
    %c0_10 = arith.constant 0 : index
    %10 = vector.load %arg5[%c0_9, %c0_10] : memref<1x32xf32, #tpu.memory_space<vmem>>, vector<1x32xf32>
    %11 = vector.broadcast %10 : vector<1x32xf32> to vector<8x32xf32>
    %12 = arith.addf %9, %11 : vector<8x32xf32>
    %cst_11 = arith.constant 0.000000e+00 : f32
    %13 = vector.broadcast %cst_11 : f32 to vector<8x32xf32>
    %14 = arith.maximumf %12, %13 : vector<8x32xf32>
    %c0_12 = arith.constant 0 : index
    %c0_13 = arith.constant 0 : index
    %15 = vector.load %arg6[%c0_12, %c0_13] : memref<32x64xf32, #tpu.memory_space<vmem>>, vector<32x64xf32>
    %cst_14 = arith.constant dense<0.000000e+00> : vector<8x64xf32>
    %16 = tpu.matmul %14, %15, %cst_14 {dimension_numbers = #tpu.dot_dimension_numbers<[1], [0], [0], [1], [0, 0, 1, 1], [], []>} : vector<8x32xf32>, vector<32x64xf32>, vector<8x64xf32> -> vector<8x64xf32>
    %c0_15 = arith.constant 0 : index
    %c0_16 = arith.constant 0 : index
    %17 = vector.load %arg7[%c0_15, %c0_16] : memref<1x64xf32, #tpu.memory_space<vmem>>, vector<1x64xf32>
    %18 = vector.broadcast %17 : vector<1x64xf32> to vector<8x64xf32>
    %19 = arith.addf %16, %18 : vector<8x64xf32>
    %cst_17 = arith.constant 0.000000e+00 : f32
    %20 = vector.broadcast %cst_17 : f32 to vector<8x64xf32>
    %21 = arith.maximumf %19, %20 : vector<8x64xf32>
    %c0_18 = arith.constant 0 : index
    %c0_19 = arith.constant 0 : index
    %22 = vector.load %arg8[%c0_18, %c0_19] : memref<64x512xf32, #tpu.memory_space<vmem>>, vector<64x512xf32>
    %cst_20 = arith.constant dense<0.000000e+00> : vector<8x512xf32>
    %23 = tpu.matmul %21, %22, %cst_20 {dimension_numbers = #tpu.dot_dimension_numbers<[1], [0], [0], [1], [0, 0, 1, 1], [], []>} : vector<8x64xf32>, vector<64x512xf32>, vector<8x512xf32> -> vector<8x512xf32>
    %c0_21 = arith.constant 0 : index
    %c0_22 = arith.constant 0 : index
    %24 = vector.load %arg9[%c0_21, %c0_22] : memref<1x512xf32, #tpu.memory_space<vmem>>, vector<1x512xf32>
    %25 = vector.broadcast %24 : vector<1x512xf32> to vector<8x512xf32>
    %26 = arith.addf %23, %25 : vector<8x512xf32>
    %c0_23 = arith.constant 0 : index
    %c0_24 = arith.constant 0 : index
    %27 = vector.load %arg11[%c0_23, %c0_24] : memref<8x512xf32, #tpu.memory_space<vmem>>, vector<8x512xf32>
    tpu.vector_store %arg11[%c0_23, %c0_24], %26 {strides = array<i32>} : memref<8x512xf32, #tpu.memory_space<vmem>>, vector<8x512xf32>,
    %c0_25 = arith.constant 0 : index
    %c0_26 = arith.constant 0 : index
    %28 = vector.load %arg11[%c0_25, %c0_26] : memref<8x512xf32, #tpu.memory_space<vmem>>, vector<8x128xf32>
    %cst_27 = arith.constant dense<0xFF800000> : vector<8xf32>
    %29 = vector.multi_reduction <maximumf>, %28, %cst_27 [1] : vector<8x128xf32> to vector<8xf32>
    %30 = vector.shape_cast %29 : vector<8xf32> to vector<8x1xf32>
    %31 = vector.broadcast %30 : vector<8x1xf32> to vector<8x128xf32>
    %32 = arith.subf %28, %31 : vector<8x128xf32>
    %33 = math.exp %32 : vector<8x128xf32>
    %cst_28 = arith.constant dense<0.000000e+00> : vector<8xf32>
    %34 = vector.multi_reduction <add>, %33, %cst_28 [1] : vector<8x128xf32> to vector<8xf32>
    %35 = vector.shape_cast %34 : vector<8xf32> to vector<8x1xf32>
    %36 = vector.broadcast %35 : vector<8x1xf32> to vector<8x128xf32>
    %37 = arith.divf %33, %36 : vector<8x128xf32>
    %c0_29 = arith.constant 0 : index
    %c0_30 = arith.constant 0 : index
    %38 = vector.load %arg10[%c0_29, %c0_30] : memref<8x512xf32, #tpu.memory_space<vmem>>, vector<8x128xf32>
    tpu.vector_store %arg10[%c0_29, %c0_30], %37 {strides = array<i32>} : memref<8x512xf32, #tpu.memory_space<vmem>>, vector<8x128xf32>,
    %c0_31 = arith.constant 0 : index
    %c128 = arith.constant 128 : index
    %39 = vector.load %arg11[%c0_31, %c128] : memref<8x512xf32, #tpu.memory_space<vmem>>, vector<8x128xf32>
    %cst_32 = arith.constant dense<0xFF800000> : vector<8xf32>
    %40 = vector.multi_reduction <maximumf>, %39, %cst_32 [1] : vector<8x128xf32> to vector<8xf32>
    %41 = vector.shape_cast %40 : vector<8xf32> to vector<8x1xf32>
    %42 = vector.broadcast %41 : vector<8x1xf32> to vector<8x128xf32>
    %43 = arith.subf %39, %42 : vector<8x128xf32>
    %44 = math.exp %43 : vector<8x128xf32>
    %cst_33 = arith.constant dense<0.000000e+00> : vector<8xf32>
    %45 = vector.multi_reduction <add>, %44, %cst_33 [1] : vector<8x128xf32> to vector<8xf32>
    %46 = vector.shape_cast %45 : vector<8xf32> to vector<8x1xf32>
    %47 = vector.broadcast %46 : vector<8x1xf32> to vector<8x128xf32>
    %48 = arith.divf %44, %47 : vector<8x128xf32>
    %c0_34 = arith.constant 0 : index
    %c128_35 = arith.constant 128 : index
    %49 = vector.load %arg10[%c0_34, %c128_35] : memref<8x512xf32, #tpu.memory_space<vmem>>, vector<8x128xf32>
    tpu.vector_store %arg10[%c0_34, %c128_35], %48 {strides = array<i32>} : memref<8x512xf32, #tpu.memory_space<vmem>>, vector<8x128xf32>,
    %c0_36 = arith.constant 0 : index
    %c256 = arith.constant 256 : index
    %50 = vector.load %arg11[%c0_36, %c256] : memref<8x512xf32, #tpu.memory_space<vmem>>, vector<8x128xf32>
    %cst_37 = arith.constant dense<0xFF800000> : vector<8xf32>
    %51 = vector.multi_reduction <maximumf>, %50, %cst_37 [1] : vector<8x128xf32> to vector<8xf32>
    %52 = vector.shape_cast %51 : vector<8xf32> to vector<8x1xf32>
    %53 = vector.broadcast %52 : vector<8x1xf32> to vector<8x128xf32>
    %54 = arith.subf %50, %53 : vector<8x128xf32>
    %55 = math.exp %54 : vector<8x128xf32>
    %cst_38 = arith.constant dense<0.000000e+00> : vector<8xf32>
    %56 = vector.multi_reduction <add>, %55, %cst_38 [1] : vector<8x128xf32> to vector<8xf32>
    %57 = vector.shape_cast %56 : vector<8xf32> to vector<8x1xf32>
    %58 = vector.broadcast %57 : vector<8x1xf32> to vector<8x128xf32>
    %59 = arith.divf %55, %58 : vector<8x128xf32>
    %c0_39 = arith.constant 0 : index
    %c256_40 = arith.constant 256 : index
    %60 = vector.load %arg10[%c0_39, %c256_40] : memref<8x512xf32, #tpu.memory_space<vmem>>, vector<8x128xf32>
    tpu.vector_store %arg10[%c0_39, %c256_40], %59 {strides = array<i32>} : memref<8x512xf32, #tpu.memory_space<vmem>>, vector<8x128xf32>,
    %c0_41 = arith.constant 0 : index
    %c384 = arith.constant 384 : index
    %61 = vector.load %arg11[%c0_41, %c384] : memref<8x512xf32, #tpu.memory_space<vmem>>, vector<8x128xf32>
    %cst_42 = arith.constant dense<0xFF800000> : vector<8xf32>
    %62 = vector.multi_reduction <maximumf>, %61, %cst_42 [1] : vector<8x128xf32> to vector<8xf32>
    %63 = vector.shape_cast %62 : vector<8xf32> to vector<8x1xf32>
    %64 = vector.broadcast %63 : vector<8x1xf32> to vector<8x128xf32>
    %65 = arith.subf %61, %64 : vector<8x128xf32>
    %66 = math.exp %65 : vector<8x128xf32>
    %cst_43 = arith.constant dense<0.000000e+00> : vector<8xf32>
    %67 = vector.multi_reduction <add>, %66, %cst_43 [1] : vector<8x128xf32> to vector<8xf32>
    %68 = vector.shape_cast %67 : vector<8xf32> to vector<8x1xf32>
    %69 = vector.broadcast %68 : vector<8x1xf32> to vector<8x128xf32>
    %70 = arith.divf %66, %69 : vector<8x128xf32>
    %c0_44 = arith.constant 0 : index
    %c384_45 = arith.constant 384 : index
    %71 = vector.load %arg10[%c0_44, %c384_45] : memref<8x512xf32, #tpu.memory_space<vmem>>, vector<8x128xf32>
    tpu.vector_store %arg10[%c0_44, %c384_45], %70 {strides = array<i32>} : memref<8x512xf32, #tpu.memory_space<vmem>>, vector<8x128xf32>,
    return
  }
  func.func @transform_0(%arg0: i32) -> (i32, i32) {
    %c0_i32 = arith.constant 0 : i32
    %c0_i32_0 = arith.constant 0 : i32
    return %arg0, %c0_i32 : i32, i32
  }
  func.func @transform_1(%arg0: i32) -> (i32, i32) {
    %c0_i32 = arith.constant 0 : i32
    %c0_i32_0 = arith.constant 0 : i32
    %c0_i32_1 = arith.constant 0 : i32
    return %c0_i32, %c0_i32_0 : i32, i32
  }
  func.func @transform_2(%arg0: i32) -> (i32, i32) {
    %c0_i32 = arith.constant 0 : i32
    %c0_i32_0 = arith.constant 0 : i32
    %c0_i32_1 = arith.constant 0 : i32
    return %c0_i32, %c0_i32_0 : i32, i32
  }
  func.func @transform_3(%arg0: i32) -> (i32, i32) {
    %c0_i32 = arith.constant 0 : i32
    %c0_i32_0 = arith.constant 0 : i32
    %c0_i32_1 = arith.constant 0 : i32
    return %c0_i32, %c0_i32_0 : i32, i32
  }
  func.func @transform_4(%arg0: i32) -> (i32, i32) {
    %c0_i32 = arith.constant 0 : i32
    %c0_i32_0 = arith.constant 0 : i32
    %c0_i32_1 = arith.constant 0 : i32
    return %c0_i32, %c0_i32_0 : i32, i32
  }
  func.func @transform_5(%arg0: i32) -> (i32, i32) {
    %c0_i32 = arith.constant 0 : i32
    %c0_i32_0 = arith.constant 0 : i32
    %c0_i32_1 = arith.constant 0 : i32
    return %c0_i32, %c0_i32_0 : i32, i32
  }
  func.func @transform_6(%arg0: i32) -> (i32, i32) {
    %c0_i32 = arith.constant 0 : i32
    %c0_i32_0 = arith.constant 0 : i32
    %c0_i32_1 = arith.constant 0 : i32
    return %c0_i32, %c0_i32_0 : i32, i32
  }
  func.func @transform_7(%arg0: i32) -> (i32, i32) {
    %c0_i32 = arith.constant 0 : i32
    %c0_i32_0 = arith.constant 0 : i32
    %c0_i32_1 = arith.constant 0 : i32
    return %c0_i32, %c0_i32_0 : i32, i32
  }
  func.func @transform_8(%arg0: i32) -> (i32, i32) {
    %c0_i32 = arith.constant 0 : i32
    %c0_i32_0 = arith.constant 0 : i32
    %c0_i32_1 = arith.constant 0 : i32
    return %c0_i32, %c0_i32_0 : i32, i32
  }
  func.func @transform_9(%arg0: i32) -> (i32, i32) {
    %c0_i32 = arith.constant 0 : i32
    %c0_i32_0 = arith.constant 0 : i32
    return %arg0, %c0_i32 : i32, i32
  }
}

</mosaic_0001>

<llo_original>
// kernel: rainbow_forward.1
$region0: #{rainbow_forward.1}
  #allocation0 [shape = 'u32[]', space=smem, size = 0x4, offset = 0x4, fixed_abs, tag = 'smem constant byte address 0x4 - core index']
  #allocation1 [shape = 'u32[72,128]{1,0:T(1,128)}', space=vmem, size = 0x9000, scoped, tag = 'internal scratch']
  #allocation2 [shape = 'f32[8,512]{1,0:T(8,128)}', space=vmem, size = 0x4000, scoped, tag = 'scratch operand']
  %s0 = inlined_call_operand.vmem [shape: f32[8,16], index: 0, kind: input, shape index: {}]
  %s1 = inlined_call_operand.vmem [shape: f32[16,32], index: 1, kind: input, shape index: {}]
  %s2 = inlined_call_operand.vmem [shape: f32[1,32], index: 2, kind: input, shape index: {}]
  %s3 = inlined_call_operand.vmem [shape: f32[32,32], index: 3, kind: input, shape index: {}]
  %s4 = inlined_call_operand.vmem [shape: f32[1,32], index: 4, kind: input, shape index: {}]
  %s5 = inlined_call_operand.vmem [shape: f32[32,64], index: 5, kind: input, shape index: {}]
  %s6 = inlined_call_operand.vmem [shape: f32[1,64], index: 6, kind: input, shape index: {}]
  %s7 = inlined_call_operand.vmem [shape: f32[64,512], index: 7, kind: input, shape index: {}]
  %s8 = inlined_call_operand.vmem [shape: f32[1,512], index: 8, kind: input, shape index: {}]
  %s9 = inlined_call_operand.vmem [shape: f32[8,512], index: 9, kind: output, shape index: {}]
  %s10 = sld [smem:[#allocation0]]
  $region46: #{rainbow_forward.1} parent=0
    _
  %s12 = ssub.s32 1, %s10
  %s13 = scalar_select 0, %s12, %s10
  // Predicated region
  $region2: #{rainbow_forward.1} parent=0 // pred_check
    _
  $region3: #{rainbow_forward.1} parent=0 // pred_check_branch
    %15 = sbr.rel (0) target = $region5
  $region4: #{rainbow_forward.1} parent=0 // pred_region
    _
  $region5: #{rainbow_forward.1} parent=0 // pred_fallthru
    _
  // Predicated region
  $region6: #{rainbow_forward.1} parent=0 // pred_check
    _
  $region7: #{rainbow_forward.1} parent=0 // pred_check_branch
    %17 = sbr.rel (0) target = $region9
  $region8: #{rainbow_forward.1} parent=0 // pred_region
    _
  $region9: #{rainbow_forward.1} parent=0 // pred_fallthru
    _
  // Predicated region
  $region10: #{rainbow_forward.1} parent=0 // pred_check
    _
  $region11: #{rainbow_forward.1} parent=0 // pred_check_branch
    %19 = sbr.rel (0) target = $region13
  $region12: #{rainbow_forward.1} parent=0 // pred_region
    _
  $region13: #{rainbow_forward.1} parent=0 // pred_fallthru
    _
  // Predicated region
  $region14: #{rainbow_forward.1} parent=0 // pred_check
    _
  $region15: #{rainbow_forward.1} parent=0 // pred_check_branch
    %21 = sbr.rel (0) target = $region17
  $region16: #{rainbow_forward.1} parent=0 // pred_region
    _
  $region17: #{rainbow_forward.1} parent=0 // pred_fallthru
    _
  // Predicated region
  $region18: #{rainbow_forward.1} parent=0 // pred_check
    _
  $region19: #{rainbow_forward.1} parent=0 // pred_check_branch
    %23 = sbr.rel (0) target = $region21
  $region20: #{rainbow_forward.1} parent=0 // pred_region
    _
  $region21: #{rainbow_forward.1} parent=0 // pred_fallthru
    _
  // Predicated region
  $region22: #{rainbow_forward.1} parent=0 // pred_check
    _
  $region23: #{rainbow_forward.1} parent=0 // pred_check_branch
    %25 = sbr.rel (0) target = $region25
  $region24: #{rainbow_forward.1} parent=0 // pred_region
    _
  $region25: #{rainbow_forward.1} parent=0 // pred_fallthru
    _
  // Predicated region
  $region26: #{rainbow_forward.1} parent=0 // pred_check
    _
  $region27: #{rainbow_forward.1} parent=0 // pred_check_branch
    %27 = sbr.rel (0) target = $region29
  $region28: #{rainbow_forward.1} parent=0 // pred_region
    _
  $region29: #{rainbow_forward.1} parent=0 // pred_fallthru
    _
  // Predicated region
  $region30: #{rainbow_forward.1} parent=0 // pred_check
    _
  $region31: #{rainbow_forward.1} parent=0 // pred_check_branch
    %29 = sbr.rel (0) target = $region33
  $region32: #{rainbow_forward.1} parent=0 // pred_region
    _
  $region33: #{rainbow_forward.1} parent=0 // pred_fallthru
    _
  // Predicated region
  $region34: #{rainbow_forward.1} parent=0 // pred_check
    _
  $region35: #{rainbow_forward.1} parent=0 // pred_check_branch
    %31 = sbr.rel (0) target = $region37
  $region36: #{rainbow_forward.1} parent=0 // pred_region
    _
  $region37: #{rainbow_forward.1} parent=0 // pred_fallthru
    _
  %v32 = vld [vmem:[%s0] sm:$0xff]
  %v33 = vld [vmem:[%s1] sm:$0xff]
  %v34 = vld [vmem:[%s1 + $0x8] sm:$0xff]
  %v35 = vld [vmem:[%s2] sm:$0x1]
  %v37 = vperm.slane %v35, 0
  %vm39 = vcmask 130048
  %v41 = vsel %vm39, %v32, 0
  %43 = vmatpush.msra.mxu0 0.0
  %44 = vmatpush.msra.mxu0 0.0
  %45 = vmatpush.msra.mxu0 0.0
  %46 = vmatpush.msra.mxu0 0.0
  %47 = vmatpush.msra.mxu0 0.0
  %48 = vmatpush.msra.mxu0 0.0
  %49 = vmatpush.msra.mxu0 0.0
  %50 = vmatpush.msra.mxu0 0.0
  %51 = vmatpush.msra.mxu0 0.0
  %52 = vmatpush.msra.mxu0 0.0
  %53 = vmatpush.msra.mxu0 0.0
  %54 = vmatpush.msra.mxu0 0.0
  %55 = vmatpush.msra.mxu0 0.0
  %56 = vmatpush.msra.mxu0 0.0
  %57 = vmatpush.msra.mxu0 %v34
  %58 = vmatpush.msra.mxu0 %v33
  %59 = vmatmul.f32.gmra.mxu0 %v41
  %v60 = vpop.f32.mrf.mxu0
  %v61 = vadd.f32 %v37, %v60
  %62 = vdwg.mxu0
  %v63 = vmax.f32 %v61, 0.0
  %v64 = vld [vmem:[%s3] sm:$0xff]
  %v65 = vld [vmem:[%s3 + $0x8] sm:$0xff]
  %v66 = vld [vmem:[%s3 + $0x10] sm:$0xff]
  %v67 = vld [vmem:[%s3 + $0x18] sm:$0xff]
  %v68 = vld [vmem:[%s4] sm:$0x1]
  %v70 = vperm.slane %v68, 0
  %vm72 = vcmask 261120
  %v74 = vsel %vm72, %v63, 0
  %76 = vmatpush.msra.mxu0 0.0
  %77 = vmatpush.msra.mxu0 0.0
  %78 = vmatpush.msra.mxu0 0.0
  %79 = vmatpush.msra.mxu0 0.0
  %80 = vmatpush.msra.mxu0 0.0
  %81 = vmatpush.msra.mxu0 0.0
  %82 = vmatpush.msra.mxu0 0.0
  %83 = vmatpush.msra.mxu0 0.0
  %84 = vmatpush.msra.mxu0 0.0
  %85 = vmatpush.msra.mxu0 0.0
  %86 = vmatpush.msra.mxu0 0.0
  %87 = vmatpush.msra.mxu0 0.0
  %88 = vmatpush.msra.mxu0 %v67
  %89 = vmatpush.msra.mxu0 %v66
  %90 = vmatpush.msra.mxu0 %v65
  %91 = vmatpush.msra.mxu0 %v64
  %92 = vmatmul.f32.gmra.mxu0 %v74
  %v93 = vpop.f32.mrf.mxu0
  %v94 = vadd.f32 %v70, %v93
  %95 = vdwg.mxu0
  %v96 = vmax.f32 %v94, 0.0
  %v97 = vld [vmem:[%s5] sm:$0xff]
  %v98 = vld [vmem:[%s5 + $0x8] sm:$0xff]
  %v99 = vld [vmem:[%s5 + $0x10] sm:$0xff]
  %v100 = vld [vmem:[%s5 + $0x18] sm:$0xff]
  %v101 = vld [vmem:[%s6] sm:$0x1]
  %v103 = vperm.slane %v101, 0
  %v106 = vsel %vm72, %v96, 0
  %108 = vmatpush.msra.mxu0 0.0
  %109 = vmatpush.msra.mxu0 0.0
  %110 = vmatpush.msra.mxu0 0.0
  %111 = vmatpush.msra.mxu0 0.0
  %112 = vmatpush.msra.mxu0 0.0
  %113 = vmatpush.msra.mxu0 0.0
  %114 = vmatpush.msra.mxu0 0.0
  %115 = vmatpush.msra.mxu0 0.0
  %116 = vmatpush.msra.mxu0 0.0
  %117 = vmatpush.msra.mxu0 0.0
  %118 = vmatpush.msra.mxu0 0.0
  %119 = vmatpush.msra.mxu0 0.0
  %120 = vmatpush.msra.mxu0 %v100
  %121 = vmatpush.msra.mxu0 %v99
  %122 = vmatpush.msra.mxu0 %v98
  %123 = vmatpush.msra.mxu0 %v97
  %124 = vmatmul.f32.gmra.mxu0 %v106
  %v125 = vpop.f32.mrf.mxu0
  %v126 = vadd.f32 %v103, %v125
  %127 = vdwg.mxu0
  %v128 = vmax.f32 %v126, 0.0
  %v129 = vld [vmem:[%s7] sm:$0xff]
  %v130 = vld [vmem:[%s7 + $0x8] sm:$0xff]
  %v131 = vld [vmem:[%s7 + $0x10] sm:$0xff]
  %v132 = vld [vmem:[%s7 + $0x18] sm:$0xff]
  %v133 = vld [vmem:[%s7 + $0x20] sm:$0xff]
  %v134 = vld [vmem:[%s7 + $0x28] sm:$0xff]
  %v135 = vld [vmem:[%s7 + $0x30] sm:$0xff]
  %v136 = vld [vmem:[%s7 + $0x38] sm:$0xff]
  %v137 = vld [vmem:[%s7 + $0x40] sm:$0xff]
  %v138 = vld [vmem:[%s7 + $0x48] sm:$0xff]
  %v139 = vld [vmem:[%s7 + $0x50] sm:$0xff]
  %v140 = vld [vmem:[%s7 + $0x58] sm:$0xff]
  %v141 = vld [vmem:[%s7 + $0x60] sm:$0xff]
  %v142 = vld [vmem:[%s7 + $0x68] sm:$0xff]
  %v143 = vld [vmem:[%s7 + $0x70] sm:$0xff]
  %v144 = vld [vmem:[%s7 + $0x78] sm:$0xff]
  %v145 = vld [vmem:[%s7 + $0x80] sm:$0xff]
  %v146 = vld [vmem:[%s7 + $0x88] sm:$0xff]
  %v147 = vld [vmem:[%s7 + $0x90] sm:$0xff]
  %v148 = vld [vmem:[%s7 + $0x98] sm:$0xff]
  %v149 = vld [vmem:[%s7 + $0xa0] sm:$0xff]
  %v150 = vld [vmem:[%s7 + $0xa8] sm:$0xff]
  %v151 = vld [vmem:[%s7 + $0xb0] sm:$0xff]
  %v152 = vld [vmem:[%s7 + $0xb8] sm:$0xff]
  %v153 = vld [vmem:[%s7 + $0xc0] sm:$0xff]
  %v154 = vld [vmem:[%s7 + $0xc8] sm:$0xff]
  %v155 = vld [vmem:[%s7 + $0xd0] sm:$0xff]
  %v156 = vld [vmem:[%s7 + $0xd8] sm:$0xff]
  %v157 = vld [vmem:[%s7 + $0xe0] sm:$0xff]
  %v158 = vld [vmem:[%s7 + $0xe8] sm:$0xff]
  %v159 = vld [vmem:[%s7 + $0xf0] sm:$0xff]
  %v160 = vld [vmem:[%s7 + $0xf8] sm:$0xff]
  %v161 = vld [vmem:[%s8] sm:$0xf]
  %v163 = vperm.slane %v161, 0
  %v164 = vperm.slane %v161, 1
  %v165 = vperm.slane %v161, 2
  %v166 = vperm.slane %v161, 3
  %vm171 = vcmask 523264
  %v173 = vsel %vm171, %v128, 0
  %175 = vmatpush.msra.mxu0 0.0
  %176 = vmatpush.msra.mxu0 0.0
  %177 = vmatpush.msra.mxu0 0.0
  %178 = vmatpush.msra.mxu0 0.0
  %179 = vmatpush.msra.mxu0 0.0
  %180 = vmatpush.msra.mxu0 0.0
  %181 = vmatpush.msra.mxu0 0.0
  %182 = vmatpush.msra.mxu0 0.0
  %183 = vmatpush.msra.mxu0 %v157
  %184 = vmatpush.msra.mxu0 %v153
  %185 = vmatpush.msra.mxu0 %v149
  %186 = vmatpush.msra.mxu0 %v145
  %187 = vmatpush.msra.mxu0 %v141
  %188 = vmatpush.msra.mxu0 %v137
  %189 = vmatpush.msra.mxu0 %v133
  %190 = vmatpush.msra.mxu0 %v129
  %191 = vmatmul.f32.gmra.mxu0 %v173
  %v192 = vpop.f32.mrf.mxu0
  %v193 = vadd.f32 %v163, %v192
  %194 = vdwg.mxu0
  %195 = vmatpush.msra.mxu0 0.0
  %196 = vmatpush.msra.mxu0 0.0
  %197 = vmatpush.msra.mxu0 0.0
  %198 = vmatpush.msra.mxu0 0.0
  %199 = vmatpush.msra.mxu0 0.0
  %200 = vmatpush.msra.mxu0 0.0
  %201 = vmatpush.msra.mxu0 0.0
  %202 = vmatpush.msra.mxu0 0.0
  %203 = vmatpush.msra.mxu0 %v158
  %204 = vmatpush.msra.mxu0 %v154
  %205 = vmatpush.msra.mxu0 %v150
  %206 = vmatpush.msra.mxu0 %v146
  %207 = vmatpush.msra.mxu0 %v142
  %208 = vmatpush.msra.mxu0 %v138
  %209 = vmatpush.msra.mxu0 %v134
  %210 = vmatpush.msra.mxu0 %v130
  %211 = vmatmul.f32.gmra.mxu0 %v173
  %v212 = vpop.f32.mrf.mxu0
  %v213 = vadd.f32 %v164, %v212
  %214 = vdwg.mxu0
  %215 = vmatpush.msra.mxu0 0.0
  %216 = vmatpush.msra.mxu0 0.0
  %217 = vmatpush.msra.mxu0 0.0
  %218 = vmatpush.msra.mxu0 0.0
  %219 = vmatpush.msra.mxu0 0.0
  %220 = vmatpush.msra.mxu0 0.0
  %221 = vmatpush.msra.mxu0 0.0
  %222 = vmatpush.msra.mxu0 0.0
  %223 = vmatpush.msra.mxu0 %v159
  %224 = vmatpush.msra.mxu0 %v155
  %225 = vmatpush.msra.mxu0 %v151
  %226 = vmatpush.msra.mxu0 %v147
  %227 = vmatpush.msra.mxu0 %v143
  %228 = vmatpush.msra.mxu0 %v139
  %229 = vmatpush.msra.mxu0 %v135
  %230 = vmatpush.msra.mxu0 %v131
  %231 = vmatmul.f32.gmra.mxu0 %v173
  %v232 = vpop.f32.mrf.mxu0
  %v233 = vadd.f32 %v165, %v232
  %234 = vdwg.mxu0
  %235 = vmatpush.msra.mxu0 0.0
  %236 = vmatpush.msra.mxu0 0.0
  %237 = vmatpush.msra.mxu0 0.0
  %238 = vmatpush.msra.mxu0 0.0
  %239 = vmatpush.msra.mxu0 0.0
  %240 = vmatpush.msra.mxu0 0.0
  %241 = vmatpush.msra.mxu0 0.0
  %242 = vmatpush.msra.mxu0 0.0
  %243 = vmatpush.msra.mxu0 %v160
  %244 = vmatpush.msra.mxu0 %v156
  %245 = vmatpush.msra.mxu0 %v152
  %246 = vmatpush.msra.mxu0 %v148
  %247 = vmatpush.msra.mxu0 %v144
  %248 = vmatpush.msra.mxu0 %v140
  %249 = vmatpush.msra.mxu0 %v136
  %250 = vmatpush.msra.mxu0 %v132
  %251 = vmatmul.f32.gmra.mxu0 %v173
  %v252 = vpop.f32.mrf.mxu0
  %v253 = vadd.f32 %v166, %v252
  %254 = vdwg.mxu0
  %255 = vst [vmem:[#allocation2] sm:$0xff] %v193
  %256 = vst [vmem:[#allocation2 + $0x8] sm:$0xff] %v213
  %257 = vst [vmem:[#allocation2 + $0x10] sm:$0xff] %v233
  %258 = vst [vmem:[#allocation2 + $0x18] sm:$0xff] %v253
  %v259 = vld [vmem:[#allocation2] sm:$0xff]
  %260 = vmax.xlane.f32.xlu0 %v259
  %v261 = vpop.xlane.xlu0 %260
  %v262 = vsub.f32 %v259, %v261
  %v263 = vmul.f32 %v262, 1.442695
  %v264 = vpow.pop %v263
  %265 = vadd.xlane.f32.xlu0 %v264
  %v266 = vpop.xlane.xlu0 %265
  %v267 = vrcp.pop %v266
  %v268 = vmul.f32 %v266, %v267
  %v269 = vsub.f32 1.0, %v268
  %v270 = vmul.f32 %v267, %v269
  %v271 = vadd.f32 %v267, %v270
  %vm272 = vweird.f32 %v266
  %vm273 = vweird.f32 %v267
  %vm274 = vmor %vm272, %vm273
  %v275 = vsel %vm274, %v267, %v271
  %v276 = vand.u32 2147483647, %v266
  %vm277 = vcmp.eq.f32.partialorder %v276, 8.507059e+37
  %v278 = vand.u32 %v266, 2147483648
  %v279 = vor.u32 1.1754944e-38, %v278
  %v280 = vsel %vm277, %v279, %v275
  %v281 = vmul.f32 %v264, %v280
  %282 = vst [vmem:[%s9] sm:$0xff] %v281
  %v283 = vld [vmem:[#allocation2 + $0x8] sm:$0xff]
  %284 = vmax.xlane.f32.xlu0 %v283
  %v285 = vpop.xlane.xlu0 %284
  %v286 = vsub.f32 %v283, %v285
  %v287 = vmul.f32 %v286, 1.442695
  %v288 = vpow.pop %v287
  %289 = vadd.xlane.f32.xlu0 %v288
  %v290 = vpop.xlane.xlu0 %289
  %v291 = vrcp.pop %v290
  %v292 = vmul.f32 %v290, %v291
  %v293 = vsub.f32 1.0, %v292
  %v294 = vmul.f32 %v291, %v293
  %v295 = vadd.f32 %v291, %v294
  %vm296 = vweird.f32 %v290
  %vm297 = vweird.f32 %v291
  %vm298 = vmor %vm296, %vm297
  %v299 = vsel %vm298, %v291, %v295
  %v300 = vand.u32 2147483647, %v290
  %vm301 = vcmp.eq.f32.partialorder %v300, 8.507059e+37
  %v302 = vand.u32 %v290, 2147483648
  %v303 = vor.u32 1.1754944e-38, %v302
  %v304 = vsel %vm301, %v303, %v299
  %v305 = vmul.f32 %v288, %v304
  %306 = vst [vmem:[%s9 + $0x8] sm:$0xff] %v305
  %v307 = vld [vmem:[#allocation2 + $0x10] sm:$0xff]
  %308 = vmax.xlane.f32.xlu0 %v307
  %v309 = vpop.xlane.xlu0 %308
  %v310 = vsub.f32 %v307, %v309
  %v311 = vmul.f32 %v310, 1.442695
  %v312 = vpow.pop %v311
  %313 = vadd.xlane.f32.xlu0 %v312
  %v314 = vpop.xlane.xlu0 %313
  %v315 = vrcp.pop %v314
  %v316 = vmul.f32 %v314, %v315
  %v317 = vsub.f32 1.0, %v316
  %v318 = vmul.f32 %v315, %v317
  %v319 = vadd.f32 %v315, %v318
  %vm320 = vweird.f32 %v314
  %vm321 = vweird.f32 %v315
  %vm322 = vmor %vm320, %vm321
  %v323 = vsel %vm322, %v315, %v319
  %v324 = vand.u32 2147483647, %v314
  %vm325 = vcmp.eq.f32.partialorder %v324, 8.507059e+37
  %v326 = vand.u32 %v314, 2147483648
  %v327 = vor.u32 1.1754944e-38, %v326
  %v328 = vsel %vm325, %v327, %v323
  %v329 = vmul.f32 %v312, %v328
  %330 = vst [vmem:[%s9 + $0x10] sm:$0xff] %v329
  %v331 = vld [vmem:[#allocation2 + $0x18] sm:$0xff]
  %332 = vmax.xlane.f32.xlu0 %v331
  %v333 = vpop.xlane.xlu0 %332
  %v334 = vsub.f32 %v331, %v333
  %v335 = vmul.f32 %v334, 1.442695
  %v336 = vpow.pop %v335
  %337 = vadd.xlane.f32.xlu0 %v336
  %v338 = vpop.xlane.xlu0 %337
  %v339 = vrcp.pop %v338
  %v340 = vmul.f32 %v338, %v339
  %v341 = vsub.f32 1.0, %v340
  %v342 = vmul.f32 %v339, %v341
  %v343 = vadd.f32 %v339, %v342
  %vm344 = vweird.f32 %v338
  %vm345 = vweird.f32 %v339
  %vm346 = vmor %vm344, %vm345
  %v347 = vsel %vm346, %v339, %v343
  %v348 = vand.u32 2147483647, %v338
  %vm349 = vcmp.eq.f32.partialorder %v348, 8.507059e+37
  %v350 = vand.u32 %v338, 2147483648
  %v351 = vor.u32 1.1754944e-38, %v350
  %v352 = vsel %vm349, %v351, %v347
  %v353 = vmul.f32 %v336, %v352
  %354 = vst [vmem:[%s9 + $0x18] sm:$0xff] %v353
  // Predicated region
  $region38: #{rainbow_forward.1} parent=0 // pred_check
    _
  $region39: #{rainbow_forward.1} parent=0 // pred_check_branch
    %356 = sbr.rel (0) target = $region41
  $region40: #{rainbow_forward.1} parent=0 // pred_region
    _
  $region41: #{rainbow_forward.1} parent=0 // pred_fallthru
    _
  // Predicated region
  $region42: #{rainbow_forward.1} parent=0 // pred_check
    _
  $region43: #{rainbow_forward.1} parent=0 // pred_check_branch
    %358 = sbr.rel (0) target = $region45
  $region44: #{rainbow_forward.1} parent=0 // pred_region
    _
  $region45: #{rainbow_forward.1} parent=0 // pred_fallthru
    _

</llo_original>
